<compile_context>
chip_gen: v7x
topology: tpu7x:2x2x1
jax: 0.10.0
libtpu: 0.0.40
codegen_flags: <defaults>
</compile_context>

<pallas_src>
import jax
import jax.numpy as jnp
from jax.experimental import pallas as pl
from jax.experimental.pallas import tpu as pltpu


def _ceil_to(x, m):
    return -(-x // m) * m


def _make_pool_kernel(pool_type, dtype, k, s, p, H, W, H_out, W_out, tile_nc):
    """Build the kernel body (and scratch list) for one pooling configuration."""
    Hp, Wp = H + 2 * p, W + 2 * p
    is_max = pool_type == "max"
    pad_val = float("-inf") if is_max else 0.0

    def _win_idx(start, size):
        # Output position o reads input index start + o*s; the stride lives on the
        # leading (H) / sublane (W) axes only -- never on the 128-lane channel axis.
        return pl.ds(start, size) if s == 1 else pl.ds(start, size, s)

    def _reduce_taps(src_ref):
        acc = None
        for i in range(k):                      # k*k static taps, ref-sliced per tap
            rows = _win_idx(i, H_out)
            for j in range(k):
                win = src_ref[rows, _win_idx(j, W_out), :]
                if not is_max:
                    win = win.astype(jnp.float32)       # avg: accumulate in f32 vregs
                if acc is None:
                    acc = win
                else:
                    acc = jnp.maximum(acc, win) if is_max else acc + win
        return acc

    def _inv_counts():
        # count_include_pad=False divisor: number of window taps that fall inside the
        # unpadded input, built from in-kernel iotas (exact, no extra input stream).
        ho = jax.lax.broadcasted_iota(jnp.int32, (H_out, W_out, 1), 0)
        wo = jax.lax.broadcasted_iota(jnp.int32, (H_out, W_out, 1), 1)
        h_cnt = jnp.minimum(ho * s - p + k, H) - jnp.maximum(ho * s - p, 0)
        w_cnt = jnp.minimum(wo * s - p + k, W) - jnp.maximum(wo * s - p, 0)
        return 1.0 / (h_cnt * w_cnt).astype(jnp.float32)

    def _store(o_ref, acc):
        if is_max:
            o_ref[...] = acc.astype(o_ref.dtype)
        else:
            o_ref[...] = (acc * _inv_counts()).astype(o_ref.dtype)

    if p == 0:
        def kernel(x_ref, o_ref):
            _store(o_ref, _reduce_taps(x_ref))
        scratch = []
    else:
        def kernel(x_ref, o_ref, xp_ref):
            # Build the padded plane in VMEM; HBM only ever carries the unpadded block.
            fill = lambda h, w: jnp.full((h, w, tile_nc), pad_val, dtype=dtype)
            xp_ref[pl.ds(0, p), :, :] = fill(p, Wp)               # top border
            xp_ref[pl.ds(p + H, p), :, :] = fill(p, Wp)           # bottom border
            xp_ref[pl.ds(p, H), pl.ds(0, p), :] = fill(H, p)      # left border
            xp_ref[pl.ds(p, H), pl.ds(p + W, p), :] = fill(H, p)  # right border
            xp_ref[pl.ds(p, H), pl.ds(p, W), :] = x_ref[...]      # interior
            _store(o_ref, _reduce_taps(xp_ref))
        scratch = [pltpu.VMEM((Hp, Wp, tile_nc), dtype)]
    return kernel, scratch


def pool2d(x_nchw, pool_type, kernel_size, stride, padding):
    pool_type = pool_type.lower()
    if pool_type not in ("max", "avg"):
        raise ValueError(pool_type)
    k, s, p = int(kernel_size), int(stride), int(padding)
    N, C, H, W = x_nchw.shape
    H_out = (H + 2 * p - k) // s + 1
    W_out = (W + 2 * p - k) // s + 1
    Hp, Wp = H + 2 * p, W + 2 * p
    NC = N * C
    dtype = x_nchw.dtype
    itemsize = jnp.dtype(dtype).itemsize

    # Channels-last, lane-dense layout (H, W, N*C): one XLA transpose in / one out.
    x_hwc = jnp.transpose(x_nchw.reshape(NC, H, W), (1, 2, 0))

    # ---- tile sizing from the *physical* (sublane-padded) VMEM footprint ----
    sub = max(8, (8 * 4) // itemsize)                    # sublane granule for this dtype
    phys = lambda h, w: h * _ceil_to(w, sub) * itemsize  # bytes per lane (= per channel)
    per_nc = 2 * phys(H, W) + 2 * phys(H_out, W_out)     # double-buffered in + out blocks
    if p > 0:
        per_nc += phys(Hp, Wp)                           # padded-plane scratch (single)
    try:
        vmem_cap = int(pltpu.get_tpu_info().vmem_capacity_bytes)
    except Exception:
        vmem_cap = 64 * 1024 * 1024                      # v7x-sized conservative fallback
    vmem_limit = int(min(vmem_cap // 2, 64 * 1024 * 1024))
    vmem_budget = vmem_limit // 2                        # headroom for compiler scratch

    lane = 128
    if NC <= lane:
        tile_nc = NC                                     # full dim on lanes is allowed
    else:
        cap = max(lane, (vmem_budget // per_nc) // lane * lane)
        # Keep >= 4 grid steps (2 TensorCores x double buffering) whenever NC allows.
        per_step = max(lane, _ceil_to(-(-NC // 4), lane))
        tile_nc = min(cap, per_step)
    grid = (pl.cdiv(NC, tile_nc),)                       # ragged last lane block is masked

    kernel, scratch = _make_pool_kernel(
        pool_type, dtype, k, s, p, H, W, H_out, W_out, tile_nc)

    out_hwc = pl.pallas_call(
        kernel,
        out_shape=jax.ShapeDtypeStruct((H_out, W_out, NC), dtype),
        grid=grid,
        in_specs=[pl.BlockSpec((H, W, tile_nc), lambda i: (0, 0, i))],
        out_specs=pl.BlockSpec((H_out, W_out, tile_nc), lambda i: (0, 0, i)),
        scratch_shapes=scratch,
        compiler_params=pltpu.CompilerParams(
            dimension_semantics=("parallel",),           # no cross-block reduction
            vmem_limit_bytes=vmem_limit),
        cost_estimate=pl.CostEstimate(
            flops=int(NC * H_out * W_out * k * k),
            transcendentals=0,
            bytes_accessed=int(itemsize * NC * (H * W + H_out * W_out))),
    )(x_hwc)

    return jnp.transpose(out_hwc, (2, 0, 1)).reshape(N, C, H_out, W_out)


class Pool:
    """Mirror of the PyTorch ENAS Pool module's forward pass."""

    def __init__(self, pool_type, kernel_size, stride, padding):
        if pool_type.lower() not in ("max", "avg"):
            raise ValueError()
        self.pool_type = pool_type.lower()
        self.kernel_size, self.stride, self.padding = kernel_size, stride, padding

    def __call__(self, x):
        return pool2d(x, self.pool_type, self.kernel_size, self.stride, self.padding)


def _reference(x, pool_type, k, s, p):
    pads = [(0, 0), (0, 0), (p, p), (p, p)]
    if pool_type == "max":
        init = jnp.array(-jnp.inf, dtype=x.dtype)
        return jax.lax.reduce_window(x, init, jax.lax.max, (1, 1, k, k), (1, 1, s, s), pads)
    zero = jnp.array(0.0, dtype=x.dtype)
    ssum = jax.lax.reduce_window(x, zero, jax.lax.add, (1, 1, k, k), (1, 1, s, s), pads)
    cnt = jax.lax.reduce_window(jnp.ones_like(x), zero, jax.lax.add,
                                (1, 1, k, k), (1, 1, s, s), pads)
    return ssum / cnt


if __name__ == "__main__":
    key = jax.random.PRNGKey(0)

    # 1) ENAS configuration: 3x3, stride 1, pad 1 (shape preserving), small NCHW input.
    x = jax.random.normal(key, (2, 4, 16, 16), dtype=jnp.float32)
    for pool_type in ("max", "avg"):
        pool = Pool(pool_type, 3, 1, 1)
        out = jax.block_until_ready(pool(x))
        ref = _reference(x, pool_type, 3, 1, 1)
        assert out.shape == ref.shape == (2, 4, 16, 16)
        assert jnp.allclose(out, ref, atol=1e-5, rtol=1e-5), pool_type

    # 2) Multi-block grid + ragged last lane block (N*C = 320 -> 128-lane tiles, grid=3).
    x_big = jax.random.normal(jax.random.PRNGKey(1), (2, 160, 16, 16), dtype=jnp.float32)
    out = jax.block_until_ready(pool2d(x_big, "max", 3, 1, 1))
    assert jnp.allclose(out, _reference(x_big, "max", 3, 1, 1), atol=1e-5, rtol=1e-5)

    # 3) Strided pooling (reduction-cell style) and a pad-free configuration.
    out = jax.block_until_ready(pool2d(x, "avg", 3, 2, 1))
    assert jnp.allclose(out, _reference(x, "avg", 3, 2, 1), atol=1e-5, rtol=1e-5)
    out = jax.block_until_ready(pool2d(x, "max", 2, 2, 0))
    assert jnp.allclose(out, _reference(x, "max", 2, 2, 0), atol=1e-5, rtol=1e-5)

    # 4) Native bf16 I/O (max pooling is exact in bf16).
    xb = x.astype(jnp.bfloat16)
    outb = jax.block_until_ready(pool2d(xb, "max", 3, 1, 1))
    assert outb.dtype == jnp.bfloat16
    assert jnp.allclose(outb.astype(jnp.float32),
                        _reference(xb, "max", 3, 1, 1).astype(jnp.float32))

    print("KERNEL_OK")
</pallas_src>

<mosaic_0001>
module attributes {stable_mosaic.version = 11 : i64} {
  func.func @kernel(%arg0: i32, %arg1: memref<16x16x8xf32, #tpu.memory_space<vmem>>, %arg2: memref<16x16x8xf32, #tpu.memory_space<vmem>>, %arg3: memref<18x18x8xf32, #tpu.memory_space<vmem>>) attributes {dimension_semantics = [#tpu.dimension_semantics<parallel>], iteration_bounds = array<i64: 1>, scalar_prefetch = 0 : i64, scratch_operands = 1 : i64, tpu.core_type = #tpu.core_type<tc>, window_params = [{transform_indices = @transform_0, window_bounds = array<i64: 16, 16, 8>}, {transform_indices = @transform_1, window_bounds = array<i64: 16, 16, 8>}]} {
    %cst = arith.constant 0xFF800000 : f32
    %0 = vector.broadcast %cst : f32 to vector<1x18x8xf32>
    %c0 = arith.constant 0 : index
    %c0_0 = arith.constant 0 : index
    %c0_1 = arith.constant 0 : index
    %1 = vector.load %arg3[%c0, %c0_0, %c0_1] : memref<18x18x8xf32, #tpu.memory_space<vmem>>, vector<1x18x8xf32>
    tpu.vector_store %arg3[%c0, %c0_0, %c0_1], %0 {strides = array<i32>} : memref<18x18x8xf32, #tpu.memory_space<vmem>>, vector<1x18x8xf32>,
    %cst_2 = arith.constant 0xFF800000 : f32
    %2 = vector.broadcast %cst_2 : f32 to vector<1x18x8xf32>
    %c17 = arith.constant 17 : index
    %c0_3 = arith.constant 0 : index
    %c0_4 = arith.constant 0 : index
    %3 = vector.load %arg3[%c17, %c0_3, %c0_4] : memref<18x18x8xf32, #tpu.memory_space<vmem>>, vector<1x18x8xf32>
    tpu.vector_store %arg3[%c17, %c0_3, %c0_4], %2 {strides = array<i32>} : memref<18x18x8xf32, #tpu.memory_space<vmem>>, vector<1x18x8xf32>,
    %cst_5 = arith.constant 0xFF800000 : f32
    %4 = vector.broadcast %cst_5 : f32 to vector<16x1x8xf32>
    %c1 = arith.constant 1 : index
    %c0_6 = arith.constant 0 : index
    %c0_7 = arith.constant 0 : index
    %5 = vector.load %arg3[%c1, %c0_6, %c0_7] : memref<18x18x8xf32, #tpu.memory_space<vmem>>, vector<16x1x8xf32>
    tpu.vector_store %arg3[%c1, %c0_6, %c0_7], %4 {strides = array<i32>} : memref<18x18x8xf32, #tpu.memory_space<vmem>>, vector<16x1x8xf32>,
    %cst_8 = arith.constant 0xFF800000 : f32
    %6 = vector.broadcast %cst_8 : f32 to vector<16x1x8xf32>
    %c1_9 = arith.constant 1 : index
    %c17_10 = arith.constant 17 : index
    %c0_11 = arith.constant 0 : index
    %7 = vector.load %arg3[%c1_9, %c17_10, %c0_11] : memref<18x18x8xf32, #tpu.memory_space<vmem>>, vector<16x1x8xf32>
    tpu.vector_store %arg3[%c1_9, %c17_10, %c0_11], %6 {strides = array<i32>} : memref<18x18x8xf32, #tpu.memory_space<vmem>>, vector<16x1x8xf32>,
    %c0_12 = arith.constant 0 : index
    %c0_13 = arith.constant 0 : index
    %c0_14 = arith.constant 0 : index
    %8 = vector.load %arg1[%c0_12, %c0_13, %c0_14] : memref<16x16x8xf32, #tpu.memory_space<vmem>>, vector<16x16x8xf32>
    %c1_15 = arith.constant 1 : index
    %c1_16 = arith.constant 1 : index
    %c0_17 = arith.constant 0 : index
    %9 = vector.load %arg3[%c1_15, %c1_16, %c0_17] : memref<18x18x8xf32, #tpu.memory_space<vmem>>, vector<16x16x8xf32>
    tpu.vector_store %arg3[%c1_15, %c1_16, %c0_17], %8 {strides = array<i32>} : memref<18x18x8xf32, #tpu.memory_space<vmem>>, vector<16x16x8xf32>,
    %c0_18 = arith.constant 0 : index
    %c0_19 = arith.constant 0 : index
    %c0_20 = arith.constant 0 : index
    %10 = vector.load %arg3[%c0_18, %c0_19, %c0_20] : memref<18x18x8xf32, #tpu.memory_space<vmem>>, vector<16x16x8xf32>
    %c0_21 = arith.constant 0 : index
    %c1_22 = arith.constant 1 : index
    %c0_23 = arith.constant 0 : index
    %11 = vector.load %arg3[%c0_21, %c1_22, %c0_23] : memref<18x18x8xf32, #tpu.memory_space<vmem>>, vector<16x16x8xf32>
    %12 = arith.maximumf %10, %11 : vector<16x16x8xf32>
    %c0_24 = arith.constant 0 : index
    %c2 = arith.constant 2 : index
    %c0_25 = arith.constant 0 : index
    %13 = vector.load %arg3[%c0_24, %c2, %c0_25] : memref<18x18x8xf32, #tpu.memory_space<vmem>>, vector<16x16x8xf32>
    %14 = arith.maximumf %12, %13 : vector<16x16x8xf32>
    %c1_26 = arith.constant 1 : index
    %c0_27 = arith.constant 0 : index
    %c0_28 = arith.constant 0 : index
    %15 = vector.load %arg3[%c1_26, %c0_27, %c0_28] : memref<18x18x8xf32, #tpu.memory_space<vmem>>, vector<16x16x8xf32>
    %16 = arith.maximumf %14, %15 : vector<16x16x8xf32>
    %c1_29 = arith.constant 1 : index
    %c1_30 = arith.constant 1 : index
    %c0_31 = arith.constant 0 : index
    %17 = vector.load %arg3[%c1_29, %c1_30, %c0_31] : memref<18x18x8xf32, #tpu.memory_space<vmem>>, vector<16x16x8xf32>
    %18 = arith.maximumf %16, %17 : vector<16x16x8xf32>
    %c1_32 = arith.constant 1 : index
    %c2_33 = arith.constant 2 : index
    %c0_34 = arith.constant 0 : index
    %19 = vector.load %arg3[%c1_32, %c2_33, %c0_34] : memref<18x18x8xf32, #tpu.memory_space<vmem>>, vector<16x16x8xf32>
    %20 = arith.maximumf %18, %19 : vector<16x16x8xf32>
    %c2_35 = arith.constant 2 : index
    %c0_36 = arith.constant 0 : index
    %c0_37 = arith.constant 0 : index
    %21 = vector.load %arg3[%c2_35, %c0_36, %c0_37] : memref<18x18x8xf32, #tpu.memory_space<vmem>>, vector<16x16x8xf32>
    %22 = arith.maximumf %20, %21 : vector<16x16x8xf32>
    %c2_38 = arith.constant 2 : index
    %c1_39 = arith.constant 1 : index
    %c0_40 = arith.constant 0 : index
    %23 = vector.load %arg3[%c2_38, %c1_39, %c0_40] : memref<18x18x8xf32, #tpu.memory_space<vmem>>, vector<16x16x8xf32>
    %24 = arith.maximumf %22, %23 : vector<16x16x8xf32>
    %c2_41 = arith.constant 2 : index
    %c2_42 = arith.constant 2 : index
    %c0_43 = arith.constant 0 : index
    %25 = vector.load %arg3[%c2_41, %c2_42, %c0_43] : memref<18x18x8xf32, #tpu.memory_space<vmem>>, vector<16x16x8xf32>
    %26 = arith.maximumf %24, %25 : vector<16x16x8xf32>
    %c0_44 = arith.constant 0 : index
    %c0_45 = arith.constant 0 : index
    %c0_46 = arith.constant 0 : index
    %27 = vector.load %arg2[%c0_44, %c0_45, %c0_46] : memref<16x16x8xf32, #tpu.memory_space<vmem>>, vector<16x16x8xf32>
    tpu.vector_store %arg2[%c0_44, %c0_45, %c0_46], %26 {strides = array<i32>} : memref<16x16x8xf32, #tpu.memory_space<vmem>>, vector<16x16x8xf32>,
    return
  }
  func.func @transform_0(%arg0: i32) -> (i32, i32, i32) {
    %c0_i32 = arith.constant 0 : i32
    %c0_i32_0 = arith.constant 0 : i32
    %c0_i32_1 = arith.constant 0 : i32
    return %c0_i32, %c0_i32_0, %arg0 : i32, i32, i32
  }
  func.func @transform_1(%arg0: i32) -> (i32, i32, i32) {
    %c0_i32 = arith.constant 0 : i32
    %c0_i32_0 = arith.constant 0 : i32
    %c0_i32_1 = arith.constant 0 : i32
    return %c0_i32, %c0_i32_0, %arg0 : i32, i32, i32
  }
}

</mosaic_0001>

<llo_original>
// kernel: tpu_custom_call.1
$region0: #{tpu_custom_call.1}
  #allocation0 [shape = 'u32[]', space=smem, size = 0x4, offset = 0x4, fixed_abs, tag = 'smem constant byte address 0x4 - core index']
  #allocation1 [shape = 'u32[144,128]{1,0:T(1,128)}', space=vmem, size = 0x12000, scoped, tag = 'internal scratch']
  #allocation2 [shape = 'f32[18,18,8]{2,1,0:T(8,128)}', space=vmem, size = 0x36000, scoped, tag = 'scratch operand']
  %s0 = inlined_call_operand.vmem [shape: f32[16,16,8], index: 0, kind: input, shape index: {}]
  %s1 = inlined_call_operand.vmem [shape: f32[16,16,8], index: 1, kind: output, shape index: {}]
  %s2 = sld [smem:[#allocation0]]
  $region14: #{tpu_custom_call.1} parent=0
    _
  %s4 = ssub.s32 1, %s2
  %s5 = scalar_select 0, %s4, %s2
  // Predicated region
  $region2: #{tpu_custom_call.1} parent=0 // pred_check
    _
  $region3: #{tpu_custom_call.1} parent=0 // pred_check_branch
    %7 = sbr.rel (0) target = $region5
  $region4: #{tpu_custom_call.1} parent=0 // pred_region
    _
  $region5: #{tpu_custom_call.1} parent=0 // pred_fallthru
    _
  %vm8 = vcmask 64512
  %9 = vst.msk [vmem:[#allocation2] sm:$0xff] %vm8, -inf
  %10 = vst.msk [vmem:[#allocation2 + $0x8] sm:$0xff] %vm8, -inf
  %vm11 = vcmask 58368
  %12 = vst.msk [vmem:[#allocation2 + $0x10] sm:$0x3] %vm11, -inf
  %s13 = scalar_lea.vmem [#allocation2], 408
  %14 = vst.msk [vmem:[%s13] sm:$0xff] %vm8, -inf
  %15 = vst.msk [vmem:[%s13 + $0x8] sm:$0xff] %vm8, -inf
  %16 = vst.msk [vmem:[%s13 + $0x10] sm:$0x3] %vm11, -inf
  %s17 = scalar_lea.vmem [#allocation2], 24
  %vm18 = vcmask 57344
  %19 = vst.msk [vmem:[%s17] sm:$0x1] %vm18, -inf
  %20 = vst.msk [vmem:[%s17 + $0x18] sm:$0x1] %vm18, -inf
  %21 = vst.msk [vmem:[%s17 + $0x30] sm:$0x1] %vm18, -inf
  %22 = vst.msk [vmem:[%s17 + $0x48] sm:$0x1] %vm18, -inf
  %23 = vst.msk [vmem:[%s17 + $0x60] sm:$0x1] %vm18, -inf
  %24 = vst.msk [vmem:[%s17 + $0x78] sm:$0x1] %vm18, -inf
  %25 = vst.msk [vmem:[%s17 + $0x90] sm:$0x1] %vm18, -inf
  %26 = vst.msk [vmem:[%s17 + $0xa8] sm:$0x1] %vm18, -inf
  %27 = vst.msk [vmem:[%s17 + $0xc0] sm:$0x1] %vm18, -inf
  %28 = vst.msk [vmem:[%s17 + $0xd8] sm:$0x1] %vm18, -inf
  %29 = vst.msk [vmem:[%s17 + $0xf0] sm:$0x1] %vm18, -inf
  %30 = vst.msk [vmem:[%s17 + $0x108] sm:$0x1] %vm18, -inf
  %31 = vst.msk [vmem:[%s17 + $0x120] sm:$0x1] %vm18, -inf
  %32 = vst.msk [vmem:[%s17 + $0x138] sm:$0x1] %vm18, -inf
  %33 = vst.msk [vmem:[%s17 + $0x150] sm:$0x1] %vm18, -inf
  %34 = vst.msk [vmem:[%s17 + $0x168] sm:$0x1] %vm18, -inf
  %35 = vst.msk [vmem:[%s17 + $0x11] sm:$0x1] %vm18, -inf
  %36 = vst.msk [vmem:[%s17 + $0x29] sm:$0x1] %vm18, -inf
  %37 = vst.msk [vmem:[%s17 + $0x41] sm:$0x1] %vm18, -inf
  %38 = vst.msk [vmem:[%s17 + $0x59] sm:$0x1] %vm18, -inf
  %39 = vst.msk [vmem:[%s17 + $0x71] sm:$0x1] %vm18, -inf
  %40 = vst.msk [vmem:[%s17 + $0x89] sm:$0x1] %vm18, -inf
  %41 = vst.msk [vmem:[%s17 + $0xa1] sm:$0x1] %vm18, -inf
  %42 = vst.msk [vmem:[%s17 + $0xb9] sm:$0x1] %vm18, -inf
  %43 = vst.msk [vmem:[%s17 + $0xd1] sm:$0x1] %vm18, -inf
  %44 = vst.msk [vmem:[%s17 + $0xe9] sm:$0x1] %vm18, -inf
  %45 = vst.msk [vmem:[%s17 + $0x101] sm:$0x1] %vm18, -inf
  %46 = vst.msk [vmem:[%s17 + $0x119] sm:$0x1] %vm18, -inf
  %47 = vst.msk [vmem:[%s17 + $0x131] sm:$0x1] %vm18, -inf
  %48 = vst.msk [vmem:[%s17 + $0x149] sm:$0x1] %vm18, -inf
  %49 = vst.msk [vmem:[%s17 + $0x161] sm:$0x1] %vm18, -inf
  %50 = vst.msk [vmem:[%s17 + $0x179] sm:$0x1] %vm18, -inf
  %v51 = vld [vmem:[%s0] sm:$0xff]
  %v52 = vld [vmem:[%s0 + $0x8] sm:$0xff]
  %v53 = vld [vmem:[%s0 + $0x10] sm:$0xff]
  %v54 = vld [vmem:[%s0 + $0x18] sm:$0xff]
  %v55 = vld [vmem:[%s0 + $0x20] sm:$0xff]
  %v56 = vld [vmem:[%s0 + $0x28] sm:$0xff]
  %v57 = vld [vmem:[%s0 + $0x30] sm:$0xff]
  %v58 = vld [vmem:[%s0 + $0x38] sm:$0xff]
  %v59 = vld [vmem:[%s0 + $0x40] sm:$0xff]
  %v60 = vld [vmem:[%s0 + $0x48] sm:$0xff]
  %v61 = vld [vmem:[%s0 + $0x50] sm:$0xff]
  %v62 = vld [vmem:[%s0 + $0x58] sm:$0xff]
  %v63 = vld [vmem:[%s0 + $0x60] sm:$0xff]
  %v64 = vld [vmem:[%s0 + $0x68] sm:$0xff]
  %v65 = vld [vmem:[%s0 + $0x70] sm:$0xff]
  %v66 = vld [vmem:[%s0 + $0x78] sm:$0xff]
  %v67 = vld [vmem:[%s0 + $0x80] sm:$0xff]
  %v68 = vld [vmem:[%s0 + $0x88] sm:$0xff]
  %v69 = vld [vmem:[%s0 + $0x90] sm:$0xff]
  %v70 = vld [vmem:[%s0 + $0x98] sm:$0xff]
  %v71 = vld [vmem:[%s0 + $0xa0] sm:$0xff]
  %v72 = vld [vmem:[%s0 + $0xa8] sm:$0xff]
  %v73 = vld [vmem:[%s0 + $0xb0] sm:$0xff]
  %v74 = vld [vmem:[%s0 + $0xb8] sm:$0xff]
  %v75 = vld [vmem:[%s0 + $0xc0] sm:$0xff]
  %v76 = vld [vmem:[%s0 + $0xc8] sm:$0xff]
  %v77 = vld [vmem:[%s0 + $0xd0] sm:$0xff]
  %v78 = vld [vmem:[%s0 + $0xd8] sm:$0xff]
  %v79 = vld [vmem:[%s0 + $0xe0] sm:$0xff]
  %v80 = vld [vmem:[%s0 + $0xe8] sm:$0xff]
  %v81 = vld [vmem:[%s0 + $0xf0] sm:$0xff]
  %v82 = vld [vmem:[%s0 + $0xf8] sm:$0xff]
  %83 = vst.msk [vmem:[%s17 + $0x1] sm:$0xff] %vm8, %v51
  %84 = vst.msk [vmem:[%s17 + $0x9] sm:$0xff] %vm8, %v52
  %85 = vst.msk [vmem:[%s17 + $0x19] sm:$0xff] %vm8, %v53
  %86 = vst.msk [vmem:[%s17 + $0x21] sm:$0xff] %vm8, %v54
  %87 = vst.msk [vmem:[%s17 + $0x31] sm:$0xff] %vm8, %v55
  %88 = vst.msk [vmem:[%s17 + $0x39] sm:$0xff] %vm8, %v56
  %89 = vst.msk [vmem:[%s17 + $0x49] sm:$0xff] %vm8, %v57
  %90 = vst.msk [vmem:[%s17 + $0x51] sm:$0xff] %vm8, %v58
  %91 = vst.msk [vmem:[%s17 + $0x61] sm:$0xff] %vm8, %v59
  %92 = vst.msk [vmem:[%s17 + $0x69] sm:$0xff] %vm8, %v60
  %93 = vst.msk [vmem:[%s17 + $0x79] sm:$0xff] %vm8, %v61
  %94 = vst.msk [vmem:[%s17 + $0x81] sm:$0xff] %vm8, %v62
  %95 = vst.msk [vmem:[%s17 + $0x91] sm:$0xff] %vm8, %v63
  %96 = vst.msk [vmem:[%s17 + $0x99] sm:$0xff] %vm8, %v64
  %97 = vst.msk [vmem:[%s17 + $0xa9] sm:$0xff] %vm8, %v65
  %98 = vst.msk [vmem:[%s17 + $0xb1] sm:$0xff] %vm8, %v66
  %99 = vst.msk [vmem:[%s17 + $0xc1] sm:$0xff] %vm8, %v67
  %100 = vst.msk [vmem:[%s17 + $0xc9] sm:$0xff] %vm8, %v68
  %101 = vst.msk [vmem:[%s17 + $0xd9] sm:$0xff] %vm8, %v69
  %102 = vst.msk [vmem:[%s17 + $0xe1] sm:$0xff] %vm8, %v70
  %103 = vst.msk [vmem:[%s17 + $0xf1] sm:$0xff] %vm8, %v71
  %104 = vst.msk [vmem:[%s17 + $0xf9] sm:$0xff] %vm8, %v72
  %105 = vst.msk [vmem:[%s17 + $0x109] sm:$0xff] %vm8, %v73
  %106 = vst.msk [vmem:[%s17 + $0x111] sm:$0xff] %vm8, %v74
  %107 = vst.msk [vmem:[%s17 + $0x121] sm:$0xff] %vm8, %v75
  %108 = vst.msk [vmem:[%s17 + $0x129] sm:$0xff] %vm8, %v76
  %109 = vst.msk [vmem:[%s17 + $0x139] sm:$0xff] %vm8, %v77
  %110 = vst.msk [vmem:[%s17 + $0x141] sm:$0xff] %vm8, %v78
  %111 = vst.msk [vmem:[%s17 + $0x151] sm:$0xff] %vm8, %v79
  %112 = vst.msk [vmem:[%s17 + $0x159] sm:$0xff] %vm8, %v80
  %113 = vst.msk [vmem:[%s17 + $0x169] sm:$0xff] %vm8, %v81
  %114 = vst.msk [vmem:[%s17 + $0x171] sm:$0xff] %vm8, %v82
  %v115 = vld [vmem:[#allocation2] sm:$0xff]
  %v116 = vld [vmem:[#allocation2 + $0x8] sm:$0xff]
  %v117 = vld [vmem:[#allocation2 + $0x18] sm:$0xff]
  %v118 = vld [vmem:[#allocation2 + $0x20] sm:$0xff]
  %v119 = vld [vmem:[#allocation2 + $0x30] sm:$0xff]
  %v120 = vld [vmem:[#allocation2 + $0x38] sm:$0xff]
  %v121 = vld [vmem:[#allocation2 + $0x48] sm:$0xff]
  %v122 = vld [vmem:[#allocation2 + $0x50] sm:$0xff]
  %v123 = vld [vmem:[#allocation2 + $0x60] sm:$0xff]
  %v124 = vld [vmem:[#allocation2 + $0x68] sm:$0xff]
  %v125 = vld [vmem:[#allocation2 + $0x78] sm:$0xff]
  %v126 = vld [vmem:[#allocation2 + $0x80] sm:$0xff]
  %v127 = vld [vmem:[#allocation2 + $0x90] sm:$0xff]
  %v128 = vld [vmem:[#allocation2 + $0x98] sm:$0xff]
  %v129 = vld [vmem:[#allocation2 + $0xa8] sm:$0xff]
  %v130 = vld [vmem:[#allocation2 + $0xb0] sm:$0xff]
  %v131 = vld [vmem:[#allocation2 + $0xc0] sm:$0xff]
  %v132 = vld [vmem:[#allocation2 + $0xc8] sm:$0xff]
  %v133 = vld [vmem:[#allocation2 + $0xd8] sm:$0xff]
  %v134 = vld [vmem:[#allocation2 + $0xe0] sm:$0xff]
  %v135 = vld [vmem:[#allocation2 + $0xf0] sm:$0xff]
  %v136 = vld [vmem:[#allocation2 + $0xf8] sm:$0xff]
  %v137 = vld [vmem:[#allocation2 + $0x108] sm:$0xff]
  %v138 = vld [vmem:[#allocation2 + $0x110] sm:$0xff]
  %v139 = vld [vmem:[#allocation2 + $0x120] sm:$0xff]
  %v140 = vld [vmem:[#allocation2 + $0x128] sm:$0xff]
  %v141 = vld [vmem:[#allocation2 + $0x138] sm:$0xff]
  %v142 = vld [vmem:[#allocation2 + $0x140] sm:$0xff]
  %v143 = vld [vmem:[#allocation2 + $0x150] sm:$0xff]
  %v144 = vld [vmem:[#allocation2 + $0x158] sm:$0xff]
  %v145 = vld [vmem:[#allocation2 + $0x168] sm:$0xff]
  %v146 = vld [vmem:[#allocation2 + $0x170] sm:$0xff]
  %v147 = vld [vmem:[#allocation2 + $0x1] sm:$0xff]
  %v148 = vld [vmem:[#allocation2 + $0x9] sm:$0xff]
  %v149 = vld [vmem:[#allocation2 + $0x19] sm:$0xff]
  %v150 = vld [vmem:[#allocation2 + $0x21] sm:$0xff]
  %v151 = vld [vmem:[#allocation2 + $0x31] sm:$0xff]
  %v152 = vld [vmem:[#allocation2 + $0x39] sm:$0xff]
  %v153 = vld [vmem:[#allocation2 + $0x49] sm:$0xff]
  %v154 = vld [vmem:[#allocation2 + $0x51] sm:$0xff]
  %v155 = vld [vmem:[#allocation2 + $0x61] sm:$0xff]
  %v156 = vld [vmem:[#allocation2 + $0x69] sm:$0xff]
  %v157 = vld [vmem:[#allocation2 + $0x79] sm:$0xff]
  %v158 = vld [vmem:[#allocation2 + $0x81] sm:$0xff]
  %v159 = vld [vmem:[#allocation2 + $0x91] sm:$0xff]
  %v160 = vld [vmem:[#allocation2 + $0x99] sm:$0xff]
  %v161 = vld [vmem:[#allocation2 + $0xa9] sm:$0xff]
  %v162 = vld [vmem:[#allocation2 + $0xb1] sm:$0xff]
  %v163 = vld [vmem:[#allocation2 + $0xc1] sm:$0xff]
  %v164 = vld [vmem:[#allocation2 + $0xc9] sm:$0xff]
  %v165 = vld [vmem:[#allocation2 + $0xd9] sm:$0xff]
  %v166 = vld [vmem:[#allocation2 + $0xe1] sm:$0xff]
  %v167 = vld [vmem:[#allocation2 + $0xf1] sm:$0xff]
  %v168 = vld [vmem:[#allocation2 + $0xf9] sm:$0xff]
  %v169 = vld [vmem:[#allocation2 + $0x109] sm:$0xff]
  %v170 = vld [vmem:[#allocation2 + $0x111] sm:$0xff]
  %v171 = vld [vmem:[#allocation2 + $0x121] sm:$0xff]
  %v172 = vld [vmem:[#allocation2 + $0x129] sm:$0xff]
  %v173 = vld [vmem:[#allocation2 + $0x139] sm:$0xff]
  %v174 = vld [vmem:[#allocation2 + $0x141] sm:$0xff]
  %v175 = vld [vmem:[#allocation2 + $0x151] sm:$0xff]
  %v176 = vld [vmem:[#allocation2 + $0x159] sm:$0xff]
  %v177 = vld [vmem:[#allocation2 + $0x169] sm:$0xff]
  %v178 = vld [vmem:[#allocation2 + $0x171] sm:$0xff]
  %v179 = vmax.f32 %v115, %v147
  %v180 = vmax.f32 %v116, %v148
  %v181 = vmax.f32 %v117, %v149
  %v182 = vmax.f32 %v118, %v150
  %v183 = vmax.f32 %v119, %v151
  %v184 = vmax.f32 %v120, %v152
  %v185 = vmax.f32 %v121, %v153
  %v186 = vmax.f32 %v122, %v154
  %v187 = vmax.f32 %v123, %v155
  %v188 = vmax.f32 %v124, %v156
  %v189 = vmax.f32 %v125, %v157
  %v190 = vmax.f32 %v126, %v158
  %v191 = vmax.f32 %v127, %v159
  %v192 = vmax.f32 %v128, %v160
  %v193 = vmax.f32 %v129, %v161
  %v194 = vmax.f32 %v130, %v162
  %v195 = vmax.f32 %v131, %v163
  %v196 = vmax.f32 %v132, %v164
  %v197 = vmax.f32 %v133, %v165
  %v198 = vmax.f32 %v134, %v166
  %v199 = vmax.f32 %v135, %v167
  %v200 = vmax.f32 %v136, %v168
  %v201 = vmax.f32 %v137, %v169
  %v202 = vmax.f32 %v138, %v170
  %v203 = vmax.f32 %v139, %v171
  %v204 = vmax.f32 %v140, %v172
  %v205 = vmax.f32 %v141, %v173
  %v206 = vmax.f32 %v142, %v174
  %v207 = vmax.f32 %v143, %v175
  %v208 = vmax.f32 %v144, %v176
  %v209 = vmax.f32 %v145, %v177
  %v210 = vmax.f32 %v146, %v178
  %v211 = vld [vmem:[#allocation2 + $0x2] sm:$0xff]
  %v212 = vld [vmem:[#allocation2 + $0xa] sm:$0xff]
  %v213 = vld [vmem:[#allocation2 + $0x1a] sm:$0xff]
  %v214 = vld [vmem:[#allocation2 + $0x22] sm:$0xff]
  %v215 = vld [vmem:[#allocation2 + $0x32] sm:$0xff]
  %v216 = vld [vmem:[#allocation2 + $0x3a] sm:$0xff]
  %v217 = vld [vmem:[#allocation2 + $0x4a] sm:$0xff]
  %v218 = vld [vmem:[#allocation2 + $0x52] sm:$0xff]
  %v219 = vld [vmem:[#allocation2 + $0x62] sm:$0xff]
  %v220 = vld [vmem:[#allocation2 + $0x6a] sm:$0xff]
  %v221 = vld [vmem:[#allocation2 + $0x7a] sm:$0xff]
  %v222 = vld [vmem:[#allocation2 + $0x82] sm:$0xff]
  %v223 = vld [vmem:[#allocation2 + $0x92] sm:$0xff]
  %v224 = vld [vmem:[#allocation2 + $0x9a] sm:$0xff]
  %v225 = vld [vmem:[#allocation2 + $0xaa] sm:$0xff]
  %v226 = vld [vmem:[#allocation2 + $0xb2] sm:$0xff]
  %v227 = vld [vmem:[#allocation2 + $0xc2] sm:$0xff]
  %v228 = vld [vmem:[#allocation2 + $0xca] sm:$0xff]
  %v229 = vld [vmem:[#allocation2 + $0xda] sm:$0xff]
  %v230 = vld [vmem:[#allocation2 + $0xe2] sm:$0xff]
  %v231 = vld [vmem:[#allocation2 + $0xf2] sm:$0xff]
  %v232 = vld [vmem:[#allocation2 + $0xfa] sm:$0xff]
  %v233 = vld [vmem:[#allocation2 + $0x10a] sm:$0xff]
  %v234 = vld [vmem:[#allocation2 + $0x112] sm:$0xff]
  %v235 = vld [vmem:[#allocation2 + $0x122] sm:$0xff]
  %v236 = vld [vmem:[#allocation2 + $0x12a] sm:$0xff]
  %v237 = vld [vmem:[#allocation2 + $0x13a] sm:$0xff]
  %v238 = vld [vmem:[#allocation2 + $0x142] sm:$0xff]
  %v239 = vld [vmem:[#allocation2 + $0x152] sm:$0xff]
  %v240 = vld [vmem:[#allocation2 + $0x15a] sm:$0xff]
  %v241 = vld [vmem:[#allocation2 + $0x16a] sm:$0xff]
  %v242 = vld [vmem:[#allocation2 + $0x172] sm:$0xff]
  %v243 = vmax.f32 %v179, %v211
  %v244 = vmax.f32 %v180, %v212
  %v245 = vmax.f32 %v181, %v213
  %v246 = vmax.f32 %v182, %v214
  %v247 = vmax.f32 %v183, %v215
  %v248 = vmax.f32 %v184, %v216
  %v249 = vmax.f32 %v185, %v217
  %v250 = vmax.f32 %v186, %v218
  %v251 = vmax.f32 %v187, %v219
  %v252 = vmax.f32 %v188, %v220
  %v253 = vmax.f32 %v189, %v221
  %v254 = vmax.f32 %v190, %v222
  %v255 = vmax.f32 %v191, %v223
  %v256 = vmax.f32 %v192, %v224
  %v257 = vmax.f32 %v193, %v225
  %v258 = vmax.f32 %v194, %v226
  %v259 = vmax.f32 %v195, %v227
  %v260 = vmax.f32 %v196, %v228
  %v261 = vmax.f32 %v197, %v229
  %v262 = vmax.f32 %v198, %v230
  %v263 = vmax.f32 %v199, %v231
  %v264 = vmax.f32 %v200, %v232
  %v265 = vmax.f32 %v201, %v233
  %v266 = vmax.f32 %v202, %v234
  %v267 = vmax.f32 %v203, %v235
  %v268 = vmax.f32 %v204, %v236
  %v269 = vmax.f32 %v205, %v237
  %v270 = vmax.f32 %v206, %v238
  %v271 = vmax.f32 %v207, %v239
  %v272 = vmax.f32 %v208, %v240
  %v273 = vmax.f32 %v209, %v241
  %v274 = vmax.f32 %v210, %v242
  %v275 = vld [vmem:[%s17] sm:$0xff]
  %v276 = vld [vmem:[%s17 + $0x8] sm:$0xff]
  %v277 = vld [vmem:[%s17 + $0x18] sm:$0xff]
  %v278 = vld [vmem:[%s17 + $0x20] sm:$0xff]
  %v279 = vld [vmem:[%s17 + $0x30] sm:$0xff]
  %v280 = vld [vmem:[%s17 + $0x38] sm:$0xff]
  %v281 = vld [vmem:[%s17 + $0x48] sm:$0xff]
  %v282 = vld [vmem:[%s17 + $0x50] sm:$0xff]
  %v283 = vld [vmem:[%s17 + $0x60] sm:$0xff]
  %v284 = vld [vmem:[%s17 + $0x68] sm:$0xff]
  %v285 = vld [vmem:[%s17 + $0x78] sm:$0xff]
  %v286 = vld [vmem:[%s17 + $0x80] sm:$0xff]
  %v287 = vld [vmem:[%s17 + $0x90] sm:$0xff]
  %v288 = vld [vmem:[%s17 + $0x98] sm:$0xff]
  %v289 = vld [vmem:[%s17 + $0xa8] sm:$0xff]
  %v290 = vld [vmem:[%s17 + $0xb0] sm:$0xff]
  %v291 = vld [vmem:[%s17 + $0xc0] sm:$0xff]
  %v292 = vld [vmem:[%s17 + $0xc8] sm:$0xff]
  %v293 = vld [vmem:[%s17 + $0xd8] sm:$0xff]
  %v294 = vld [vmem:[%s17 + $0xe0] sm:$0xff]
  %v295 = vld [vmem:[%s17 + $0xf0] sm:$0xff]
  %v296 = vld [vmem:[%s17 + $0xf8] sm:$0xff]
  %v297 = vld [vmem:[%s17 + $0x108] sm:$0xff]
  %v298 = vld [vmem:[%s17 + $0x110] sm:$0xff]
  %v299 = vld [vmem:[%s17 + $0x120] sm:$0xff]
  %v300 = vld [vmem:[%s17 + $0x128] sm:$0xff]
  %v301 = vld [vmem:[%s17 + $0x138] sm:$0xff]
  %v302 = vld [vmem:[%s17 + $0x140] sm:$0xff]
  %v303 = vld [vmem:[%s17 + $0x150] sm:$0xff]
  %v304 = vld [vmem:[%s17 + $0x158] sm:$0xff]
  %v305 = vld [vmem:[%s17 + $0x168] sm:$0xff]
  %v306 = vld [vmem:[%s17 + $0x170] sm:$0xff]
  %v307 = vmax.f32 %v243, %v275
  %v308 = vmax.f32 %v244, %v276
  %v309 = vmax.f32 %v245, %v277
  %v310 = vmax.f32 %v246, %v278
  %v311 = vmax.f32 %v247, %v279
  %v312 = vmax.f32 %v248, %v280
  %v313 = vmax.f32 %v249, %v281
  %v314 = vmax.f32 %v250, %v282
  %v315 = vmax.f32 %v251, %v283
  %v316 = vmax.f32 %v252, %v284
  %v317 = vmax.f32 %v253, %v285
  %v318 = vmax.f32 %v254, %v286
  %v319 = vmax.f32 %v255, %v287
  %v320 = vmax.f32 %v256, %v288
  %v321 = vmax.f32 %v257, %v289
  %v322 = vmax.f32 %v258, %v290
  %v323 = vmax.f32 %v259, %v291
  %v324 = vmax.f32 %v260, %v292
  %v325 = vmax.f32 %v261, %v293
  %v326 = vmax.f32 %v262, %v294
  %v327 = vmax.f32 %v263, %v295
  %v328 = vmax.f32 %v264, %v296
  %v329 = vmax.f32 %v265, %v297
  %v330 = vmax.f32 %v266, %v298
  %v331 = vmax.f32 %v267, %v299
  %v332 = vmax.f32 %v268, %v300
  %v333 = vmax.f32 %v269, %v301
  %v334 = vmax.f32 %v270, %v302
  %v335 = vmax.f32 %v271, %v303
  %v336 = vmax.f32 %v272, %v304
  %v337 = vmax.f32 %v273, %v305
  %v338 = vmax.f32 %v274, %v306
  %v339 = vld [vmem:[%s17 + $0x1] sm:$0xff]
  %v340 = vld [vmem:[%s17 + $0x9] sm:$0xff]
  %v341 = vld [vmem:[%s17 + $0x19] sm:$0xff]
  %v342 = vld [vmem:[%s17 + $0x21] sm:$0xff]
  %v343 = vld [vmem:[%s17 + $0x31] sm:$0xff]
  %v344 = vld [vmem:[%s17 + $0x39] sm:$0xff]
  %v345 = vld [vmem:[%s17 + $0x49] sm:$0xff]
  %v346 = vld [vmem:[%s17 + $0x51] sm:$0xff]
  %v347 = vld [vmem:[%s17 + $0x61] sm:$0xff]
  %v348 = vld [vmem:[%s17 + $0x69] sm:$0xff]
  %v349 = vld [vmem:[%s17 + $0x79] sm:$0xff]
  %v350 = vld [vmem:[%s17 + $0x81] sm:$0xff]
  %v351 = vld [vmem:[%s17 + $0x91] sm:$0xff]
  %v352 = vld [vmem:[%s17 + $0x99] sm:$0xff]
  %v353 = vld [vmem:[%s17 + $0xa9] sm:$0xff]
  %v354 = vld [vmem:[%s17 + $0xb1] sm:$0xff]
  %v355 = vld [vmem:[%s17 + $0xc1] sm:$0xff]
  %v356 = vld [vmem:[%s17 + $0xc9] sm:$0xff]
  %v357 = vld [vmem:[%s17 + $0xd9] sm:$0xff]
  %v358 = vld [vmem:[%s17 + $0xe1] sm:$0xff]
  %v359 = vld [vmem:[%s17 + $0xf1] sm:$0xff]
  %v360 = vld [vmem:[%s17 + $0xf9] sm:$0xff]
  %v361 = vld [vmem:[%s17 + $0x109] sm:$0xff]
  %v362 = vld [vmem:[%s17 + $0x111] sm:$0xff]
  %v363 = vld [vmem:[%s17 + $0x121] sm:$0xff]
  %v364 = vld [vmem:[%s17 + $0x129] sm:$0xff]
  %v365 = vld [vmem:[%s17 + $0x139] sm:$0xff]
  %v366 = vld [vmem:[%s17 + $0x141] sm:$0xff]
  %v367 = vld [vmem:[%s17 + $0x151] sm:$0xff]
  %v368 = vld [vmem:[%s17 + $0x159] sm:$0xff]
  %v369 = vld [vmem:[%s17 + $0x169] sm:$0xff]
  %v370 = vld [vmem:[%s17 + $0x171] sm:$0xff]
  %v371 = vmax.f32 %v307, %v339
  %v372 = vmax.f32 %v308, %v340
  %v373 = vmax.f32 %v309, %v341
  %v374 = vmax.f32 %v310, %v342
  %v375 = vmax.f32 %v311, %v343
  %v376 = vmax.f32 %v312, %v344
  %v377 = vmax.f32 %v313, %v345
  %v378 = vmax.f32 %v314, %v346
  %v379 = vmax.f32 %v315, %v347
  %v380 = vmax.f32 %v316, %v348
  %v381 = vmax.f32 %v317, %v349
  %v382 = vmax.f32 %v318, %v350
  %v383 = vmax.f32 %v319, %v351
  %v384 = vmax.f32 %v320, %v352
  %v385 = vmax.f32 %v321, %v353
  %v386 = vmax.f32 %v322, %v354
  %v387 = vmax.f32 %v323, %v355
  %v388 = vmax.f32 %v324, %v356
  %v389 = vmax.f32 %v325, %v357
  %v390 = vmax.f32 %v326, %v358
  %v391 = vmax.f32 %v327, %v359
  %v392 = vmax.f32 %v328, %v360
  %v393 = vmax.f32 %v329, %v361
  %v394 = vmax.f32 %v330, %v362
  %v395 = vmax.f32 %v331, %v363
  %v396 = vmax.f32 %v332, %v364
  %v397 = vmax.f32 %v333, %v365
  %v398 = vmax.f32 %v334, %v366
  %v399 = vmax.f32 %v335, %v367
  %v400 = vmax.f32 %v336, %v368
  %v401 = vmax.f32 %v337, %v369
  %v402 = vmax.f32 %v338, %v370
  %v403 = vld [vmem:[%s17 + $0x2] sm:$0xff]
  %v404 = vld [vmem:[%s17 + $0xa] sm:$0xff]
  %v405 = vld [vmem:[%s17 + $0x1a] sm:$0xff]
  %v406 = vld [vmem:[%s17 + $0x22] sm:$0xff]
  %v407 = vld [vmem:[%s17 + $0x32] sm:$0xff]
  %v408 = vld [vmem:[%s17 + $0x3a] sm:$0xff]
  %v409 = vld [vmem:[%s17 + $0x4a] sm:$0xff]
  %v410 = vld [vmem:[%s17 + $0x52] sm:$0xff]
  %v411 = vld [vmem:[%s17 + $0x62] sm:$0xff]
  %v412 = vld [vmem:[%s17 + $0x6a] sm:$0xff]
  %v413 = vld [vmem:[%s17 + $0x7a] sm:$0xff]
  %v414 = vld [vmem:[%s17 + $0x82] sm:$0xff]
  %v415 = vld [vmem:[%s17 + $0x92] sm:$0xff]
  %v416 = vld [vmem:[%s17 + $0x9a] sm:$0xff]
  %v417 = vld [vmem:[%s17 + $0xaa] sm:$0xff]
  %v418 = vld [vmem:[%s17 + $0xb2] sm:$0xff]
  %v419 = vld [vmem:[%s17 + $0xc2] sm:$0xff]
  %v420 = vld [vmem:[%s17 + $0xca] sm:$0xff]
  %v421 = vld [vmem:[%s17 + $0xda] sm:$0xff]
  %v422 = vld [vmem:[%s17 + $0xe2] sm:$0xff]
  %v423 = vld [vmem:[%s17 + $0xf2] sm:$0xff]
  %v424 = vld [vmem:[%s17 + $0xfa] sm:$0xff]
  %v425 = vld [vmem:[%s17 + $0x10a] sm:$0xff]
  %v426 = vld [vmem:[%s17 + $0x112] sm:$0xff]
  %v427 = vld [vmem:[%s17 + $0x122] sm:$0xff]
  %v428 = vld [vmem:[%s17 + $0x12a] sm:$0xff]
  %v429 = vld [vmem:[%s17 + $0x13a] sm:$0xff]
  %v430 = vld [vmem:[%s17 + $0x142] sm:$0xff]
  %v431 = vld [vmem:[%s17 + $0x152] sm:$0xff]
  %v432 = vld [vmem:[%s17 + $0x15a] sm:$0xff]
  %v433 = vld [vmem:[%s17 + $0x16a] sm:$0xff]
  %v434 = vld [vmem:[%s17 + $0x172] sm:$0xff]
  %v435 = vmax.f32 %v371, %v403
  %v436 = vmax.f32 %v372, %v404
  %v437 = vmax.f32 %v373, %v405
  %v438 = vmax.f32 %v374, %v406
  %v439 = vmax.f32 %v375, %v407
  %v440 = vmax.f32 %v376, %v408
  %v441 = vmax.f32 %v377, %v409
  %v442 = vmax.f32 %v378, %v410
  %v443 = vmax.f32 %v379, %v411
  %v444 = vmax.f32 %v380, %v412
  %v445 = vmax.f32 %v381, %v413
  %v446 = vmax.f32 %v382, %v414
  %v447 = vmax.f32 %v383, %v415
  %v448 = vmax.f32 %v384, %v416
  %v449 = vmax.f32 %v385, %v417
  %v450 = vmax.f32 %v386, %v418
  %v451 = vmax.f32 %v387, %v419
  %v452 = vmax.f32 %v388, %v420
  %v453 = vmax.f32 %v389, %v421
  %v454 = vmax.f32 %v390, %v422
  %v455 = vmax.f32 %v391, %v423
  %v456 = vmax.f32 %v392, %v424
  %v457 = vmax.f32 %v393, %v425
  %v458 = vmax.f32 %v394, %v426
  %v459 = vmax.f32 %v395, %v427
  %v460 = vmax.f32 %v396, %v428
  %v461 = vmax.f32 %v397, %v429
  %v462 = vmax.f32 %v398, %v430
  %v463 = vmax.f32 %v399, %v431
  %v464 = vmax.f32 %v400, %v432
  %v465 = vmax.f32 %v401, %v433
  %v466 = vmax.f32 %v402, %v434
  %s467 = scalar_lea.vmem [#allocation2], 48
  %v468 = vld [vmem:[%s467] sm:$0xff]
  %v469 = vld [vmem:[%s467 + $0x8] sm:$0xff]
  %v470 = vld [vmem:[%s467 + $0x18] sm:$0xff]
  %v471 = vld [vmem:[%s467 + $0x20] sm:$0xff]
  %v472 = vld [vmem:[%s467 + $0x30] sm:$0xff]
  %v473 = vld [vmem:[%s467 + $0x38] sm:$0xff]
  %v474 = vld [vmem:[%s467 + $0x48] sm:$0xff]
  %v475 = vld [vmem:[%s467 + $0x50] sm:$0xff]
  %v476 = vld [vmem:[%s467 + $0x60] sm:$0xff]
  %v477 = vld [vmem:[%s467 + $0x68] sm:$0xff]
  %v478 = vld [vmem:[%s467 + $0x78] sm:$0xff]
  %v479 = vld [vmem:[%s467 + $0x80] sm:$0xff]
  %v480 = vld [vmem:[%s467 + $0x90] sm:$0xff]
  %v481 = vld [vmem:[%s467 + $0x98] sm:$0xff]
  %v482 = vld [vmem:[%s467 + $0xa8] sm:$0xff]
  %v483 = vld [vmem:[%s467 + $0xb0] sm:$0xff]
  %v484 = vld [vmem:[%s467 + $0xc0] sm:$0xff]
  %v485 = vld [vmem:[%s467 + $0xc8] sm:$0xff]
  %v486 = vld [vmem:[%s467 + $0xd8] sm:$0xff]
  %v487 = vld [vmem:[%s467 + $0xe0] sm:$0xff]
  %v488 = vld [vmem:[%s467 + $0xf0] sm:$0xff]
  %v489 = vld [vmem:[%s467 + $0xf8] sm:$0xff]
  %v490 = vld [vmem:[%s467 + $0x108] sm:$0xff]
  %v491 = vld [vmem:[%s467 + $0x110] sm:$0xff]
  %v492 = vld [vmem:[%s467 + $0x120] sm:$0xff]
  %v493 = vld [vmem:[%s467 + $0x128] sm:$0xff]
  %v494 = vld [vmem:[%s467 + $0x138] sm:$0xff]
  %v495 = vld [vmem:[%s467 + $0x140] sm:$0xff]
  %v496 = vld [vmem:[%s467 + $0x150] sm:$0xff]
  %v497 = vld [vmem:[%s467 + $0x158] sm:$0xff]
  %v498 = vld [vmem:[%s467 + $0x168] sm:$0xff]
  %v499 = vld [vmem:[%s467 + $0x170] sm:$0xff]
  %v500 = vmax.f32 %v435, %v468
  %v501 = vmax.f32 %v436, %v469
  %v502 = vmax.f32 %v437, %v470
  %v503 = vmax.f32 %v438, %v471
  %v504 = vmax.f32 %v439, %v472
  %v505 = vmax.f32 %v440, %v473
  %v506 = vmax.f32 %v441, %v474
  %v507 = vmax.f32 %v442, %v475
  %v508 = vmax.f32 %v443, %v476
  %v509 = vmax.f32 %v444, %v477
  %v510 = vmax.f32 %v445, %v478
  %v511 = vmax.f32 %v446, %v479
  %v512 = vmax.f32 %v447, %v480
  %v513 = vmax.f32 %v448, %v481
  %v514 = vmax.f32 %v449, %v482
  %v515 = vmax.f32 %v450, %v483
  %v516 = vmax.f32 %v451, %v484
  %v517 = vmax.f32 %v452, %v485
  %v518 = vmax.f32 %v453, %v486
  %v519 = vmax.f32 %v454, %v487
  %v520 = vmax.f32 %v455, %v488
  %v521 = vmax.f32 %v456, %v489
  %v522 = vmax.f32 %v457, %v490
  %v523 = vmax.f32 %v458, %v491
  %v524 = vmax.f32 %v459, %v492
  %v525 = vmax.f32 %v460, %v493
  %v526 = vmax.f32 %v461, %v494
  %v527 = vmax.f32 %v462, %v495
  %v528 = vmax.f32 %v463, %v496
  %v529 = vmax.f32 %v464, %v497
  %v530 = vmax.f32 %v465, %v498
  %v531 = vmax.f32 %v466, %v499
  %v532 = vld [vmem:[%s467 + $0x1] sm:$0xff]
  %v533 = vld [vmem:[%s467 + $0x9] sm:$0xff]
  %v534 = vld [vmem:[%s467 + $0x19] sm:$0xff]
  %v535 = vld [vmem:[%s467 + $0x21] sm:$0xff]
  %v536 = vld [vmem:[%s467 + $0x31] sm:$0xff]
  %v537 = vld [vmem:[%s467 + $0x39] sm:$0xff]
  %v538 = vld [vmem:[%s467 + $0x49] sm:$0xff]
  %v539 = vld [vmem:[%s467 + $0x51] sm:$0xff]
  %v540 = vld [vmem:[%s467 + $0x61] sm:$0xff]
  %v541 = vld [vmem:[%s467 + $0x69] sm:$0xff]
  %v542 = vld [vmem:[%s467 + $0x79] sm:$0xff]
  %v543 = vld [vmem:[%s467 + $0x81] sm:$0xff]
  %v544 = vld [vmem:[%s467 + $0x91] sm:$0xff]
  %v545 = vld [vmem:[%s467 + $0x99] sm:$0xff]
  %v546 = vld [vmem:[%s467 + $0xa9] sm:$0xff]
  %v547 = vld [vmem:[%s467 + $0xb1] sm:$0xff]
  %v548 = vld [vmem:[%s467 + $0xc1] sm:$0xff]
  %v549 = vld [vmem:[%s467 + $0xc9] sm:$0xff]
  %v550 = vld [vmem:[%s467 + $0xd9] sm:$0xff]
  %v551 = vld [vmem:[%s467 + $0xe1] sm:$0xff]
  %v552 = vld [vmem:[%s467 + $0xf1] sm:$0xff]
  %v553 = vld [vmem:[%s467 + $0xf9] sm:$0xff]
  %v554 = vld [vmem:[%s467 + $0x109] sm:$0xff]
  %v555 = vld [vmem:[%s467 + $0x111] sm:$0xff]
  %v556 = vld [vmem:[%s467 + $0x121] sm:$0xff]
  %v557 = vld [vmem:[%s467 + $0x129] sm:$0xff]
  %v558 = vld [vmem:[%s467 + $0x139] sm:$0xff]
  %v559 = vld [vmem:[%s467 + $0x141] sm:$0xff]
  %v560 = vld [vmem:[%s467 + $0x151] sm:$0xff]
  %v561 = vld [vmem:[%s467 + $0x159] sm:$0xff]
  %v562 = vld [vmem:[%s467 + $0x169] sm:$0xff]
  %v563 = vld [vmem:[%s467 + $0x171] sm:$0xff]
  %v564 = vmax.f32 %v500, %v532
  %v565 = vmax.f32 %v501, %v533
  %v566 = vmax.f32 %v502, %v534
  %v567 = vmax.f32 %v503, %v535
  %v568 = vmax.f32 %v504, %v536
  %v569 = vmax.f32 %v505, %v537
  %v570 = vmax.f32 %v506, %v538
  %v571 = vmax.f32 %v507, %v539
  %v572 = vmax.f32 %v508, %v540
  %v573 = vmax.f32 %v509, %v541
  %v574 = vmax.f32 %v510, %v542
  %v575 = vmax.f32 %v511, %v543
  %v576 = vmax.f32 %v512, %v544
  %v577 = vmax.f32 %v513, %v545
  %v578 = vmax.f32 %v514, %v546
  %v579 = vmax.f32 %v515, %v547
  %v580 = vmax.f32 %v516, %v548
  %v581 = vmax.f32 %v517, %v549
  %v582 = vmax.f32 %v518, %v550
  %v583 = vmax.f32 %v519, %v551
  %v584 = vmax.f32 %v520, %v552
  %v585 = vmax.f32 %v521, %v553
  %v586 = vmax.f32 %v522, %v554
  %v587 = vmax.f32 %v523, %v555
  %v588 = vmax.f32 %v524, %v556
  %v589 = vmax.f32 %v525, %v557
  %v590 = vmax.f32 %v526, %v558
  %v591 = vmax.f32 %v527, %v559
  %v592 = vmax.f32 %v528, %v560
  %v593 = vmax.f32 %v529, %v561
  %v594 = vmax.f32 %v530, %v562
  %v595 = vmax.f32 %v531, %v563
  %v596 = vld [vmem:[%s467 + $0x2] sm:$0xff]
  %v597 = vld [vmem:[%s467 + $0xa] sm:$0xff]
  %v598 = vld [vmem:[%s467 + $0x1a] sm:$0xff]
  %v599 = vld [vmem:[%s467 + $0x22] sm:$0xff]
  %v600 = vld [vmem:[%s467 + $0x32] sm:$0xff]
  %v601 = vld [vmem:[%s467 + $0x3a] sm:$0xff]
  %v602 = vld [vmem:[%s467 + $0x4a] sm:$0xff]
  %v603 = vld [vmem:[%s467 + $0x52] sm:$0xff]
  %v604 = vld [vmem:[%s467 + $0x62] sm:$0xff]
  %v605 = vld [vmem:[%s467 + $0x6a] sm:$0xff]
  %v606 = vld [vmem:[%s467 + $0x7a] sm:$0xff]
  %v607 = vld [vmem:[%s467 + $0x82] sm:$0xff]
  %v608 = vld [vmem:[%s467 + $0x92] sm:$0xff]
  %v609 = vld [vmem:[%s467 + $0x9a] sm:$0xff]
  %v610 = vld [vmem:[%s467 + $0xaa] sm:$0xff]
  %v611 = vld [vmem:[%s467 + $0xb2] sm:$0xff]
  %v612 = vld [vmem:[%s467 + $0xc2] sm:$0xff]
  %v613 = vld [vmem:[%s467 + $0xca] sm:$0xff]
  %v614 = vld [vmem:[%s467 + $0xda] sm:$0xff]
  %v615 = vld [vmem:[%s467 + $0xe2] sm:$0xff]
  %v616 = vld [vmem:[%s467 + $0xf2] sm:$0xff]
  %v617 = vld [vmem:[%s467 + $0xfa] sm:$0xff]
  %v618 = vld [vmem:[%s467 + $0x10a] sm:$0xff]
  %v619 = vld [vmem:[%s467 + $0x112] sm:$0xff]
  %v620 = vld [vmem:[%s467 + $0x122] sm:$0xff]
  %v621 = vld [vmem:[%s467 + $0x12a] sm:$0xff]
  %v622 = vld [vmem:[%s467 + $0x13a] sm:$0xff]
  %v623 = vld [vmem:[%s467 + $0x142] sm:$0xff]
  %v624 = vld [vmem:[%s467 + $0x152] sm:$0xff]
  %v625 = vld [vmem:[%s467 + $0x15a] sm:$0xff]
  %v626 = vld [vmem:[%s467 + $0x16a] sm:$0xff]
  %v627 = vld [vmem:[%s467 + $0x172] sm:$0xff]
  %v628 = vmax.f32 %v564, %v596
  %v629 = vmax.f32 %v565, %v597
  %v630 = vmax.f32 %v566, %v598
  %v631 = vmax.f32 %v567, %v599
  %v632 = vmax.f32 %v568, %v600
  %v633 = vmax.f32 %v569, %v601
  %v634 = vmax.f32 %v570, %v602
  %v635 = vmax.f32 %v571, %v603
  %v636 = vmax.f32 %v572, %v604
  %v637 = vmax.f32 %v573, %v605
  %v638 = vmax.f32 %v574, %v606
  %v639 = vmax.f32 %v575, %v607
  %v640 = vmax.f32 %v576, %v608
  %v641 = vmax.f32 %v577, %v609
  %v642 = vmax.f32 %v578, %v610
  %v643 = vmax.f32 %v579, %v611
  %v644 = vmax.f32 %v580, %v612
  %v645 = vmax.f32 %v581, %v613
  %v646 = vmax.f32 %v582, %v614
  %v647 = vmax.f32 %v583, %v615
  %v648 = vmax.f32 %v584, %v616
  %v649 = vmax.f32 %v585, %v617
  %v650 = vmax.f32 %v586, %v618
  %v651 = vmax.f32 %v587, %v619
  %v652 = vmax.f32 %v588, %v620
  %v653 = vmax.f32 %v589, %v621
  %v654 = vmax.f32 %v590, %v622
  %v655 = vmax.f32 %v591, %v623
  %v656 = vmax.f32 %v592, %v624
  %v657 = vmax.f32 %v593, %v625
  %v658 = vmax.f32 %v594, %v626
  %v659 = vmax.f32 %v595, %v627
  %660 = vst.msk [vmem:[%s1] sm:$0xff] %vm8, %v628
  %661 = vst.msk [vmem:[%s1 + $0x8] sm:$0xff] %vm8, %v629
  %662 = vst.msk [vmem:[%s1 + $0x10] sm:$0xff] %vm8, %v630
  %663 = vst.msk [vmem:[%s1 + $0x18] sm:$0xff] %vm8, %v631
  %664 = vst.msk [vmem:[%s1 + $0x20] sm:$0xff] %vm8, %v632
  %665 = vst.msk [vmem:[%s1 + $0x28] sm:$0xff] %vm8, %v633
  %666 = vst.msk [vmem:[%s1 + $0x30] sm:$0xff] %vm8, %v634
  %667 = vst.msk [vmem:[%s1 + $0x38] sm:$0xff] %vm8, %v635
  %668 = vst.msk [vmem:[%s1 + $0x40] sm:$0xff] %vm8, %v636
  %669 = vst.msk [vmem:[%s1 + $0x48] sm:$0xff] %vm8, %v637
  %670 = vst.msk [vmem:[%s1 + $0x50] sm:$0xff] %vm8, %v638
  %671 = vst.msk [vmem:[%s1 + $0x58] sm:$0xff] %vm8, %v639
  %672 = vst.msk [vmem:[%s1 + $0x60] sm:$0xff] %vm8, %v640
  %673 = vst.msk [vmem:[%s1 + $0x68] sm:$0xff] %vm8, %v641
  %674 = vst.msk [vmem:[%s1 + $0x70] sm:$0xff] %vm8, %v642
  %675 = vst.msk [vmem:[%s1 + $0x78] sm:$0xff] %vm8, %v643
  %676 = vst.msk [vmem:[%s1 + $0x80] sm:$0xff] %vm8, %v644
  %677 = vst.msk [vmem:[%s1 + $0x88] sm:$0xff] %vm8, %v645
  %678 = vst.msk [vmem:[%s1 + $0x90] sm:$0xff] %vm8, %v646
  %679 = vst.msk [vmem:[%s1 + $0x98] sm:$0xff] %vm8, %v647
  %680 = vst.msk [vmem:[%s1 + $0xa0] sm:$0xff] %vm8, %v648
  %681 = vst.msk [vmem:[%s1 + $0xa8] sm:$0xff] %vm8, %v649
  %682 = vst.msk [vmem:[%s1 + $0xb0] sm:$0xff] %vm8, %v650
  %683 = vst.msk [vmem:[%s1 + $0xb8] sm:$0xff] %vm8, %v651
  %684 = vst.msk [vmem:[%s1 + $0xc0] sm:$0xff] %vm8, %v652
  %685 = vst.msk [vmem:[%s1 + $0xc8] sm:$0xff] %vm8, %v653
  %686 = vst.msk [vmem:[%s1 + $0xd0] sm:$0xff] %vm8, %v654
  %687 = vst.msk [vmem:[%s1 + $0xd8] sm:$0xff] %vm8, %v655
  %688 = vst.msk [vmem:[%s1 + $0xe0] sm:$0xff] %vm8, %v656
  %689 = vst.msk [vmem:[%s1 + $0xe8] sm:$0xff] %vm8, %v657
  %690 = vst.msk [vmem:[%s1 + $0xf0] sm:$0xff] %vm8, %v658
  %691 = vst.msk [vmem:[%s1 + $0xf8] sm:$0xff] %vm8, %v659
  // Predicated region
  $region6: #{tpu_custom_call.1} parent=0 // pred_check
    _
  $region7: #{tpu_custom_call.1} parent=0 // pred_check_branch
    %693 = sbr.rel (0) target = $region9
  $region8: #{tpu_custom_call.1} parent=0 // pred_region
    _
  $region9: #{tpu_custom_call.1} parent=0 // pred_fallthru
    _
  // Predicated region
  $region10: #{tpu_custom_call.1} parent=0 // pred_check
    _
  $region11: #{tpu_custom_call.1} parent=0 // pred_check_branch
    %695 = sbr.rel (0) target = $region13
  $region12: #{tpu_custom_call.1} parent=0 // pred_region
    _
  $region13: #{tpu_custom_call.1} parent=0 // pred_fallthru
    _

</llo_original>
